<compile_context>
chip_gen: v7x
topology: tpu7x:2x2x1
jax: 0.10.0
libtpu: 0.0.40
codegen_flags: <defaults>
</compile_context>

<pallas_src>
from functools import partial

import jax
import jax.numpy as jnp
import numpy as np
from jax.experimental import pallas as pl
from jax.experimental.pallas import tpu as pltpu

_NORM_EPS = 1e-12  # matches torch.nn.functional.normalize default eps


def _l2_normalize_last(x):
    """L2-normalize along the last (lane) axis, torch F.normalize semantics."""
    nrm = jnp.sqrt(jnp.sum(x * x, axis=-1, keepdims=True))
    return x / jnp.maximum(nrm, _NORM_EPS)


def _nce(q_raw, k_raw, neg_raw, inv_temperature):
    """InfoNCE with label 0 == CrossEntropy(-l_pos + logsumexp([l_pos, l_neg]))."""
    q = _l2_normalize_last(q_raw)        # [N, C]
    k = _l2_normalize_last(k_raw)        # [N, C]
    neg = _l2_normalize_last(neg_raw)    # [N, K, C]  (== normalize(neg.permute(0,2,1), dim=1))

    l_pos = jnp.sum(q * k, axis=-1, keepdims=True) * inv_temperature          # [N, 1]
    l_neg = jnp.sum(q[:, None, :] * neg, axis=-1) * inv_temperature           # [N, K]

    # Numerically stable logsumexp over the concatenated [l_pos | l_neg] logits
    # without materializing a lane-concatenation.
    m = jnp.maximum(l_pos, jnp.max(l_neg, axis=-1, keepdims=True))            # [N, 1]
    lse = m + jnp.log(jnp.exp(l_pos - m)
                      + jnp.sum(jnp.exp(l_neg - m), axis=-1, keepdims=True))  # [N, 1]
    return jnp.mean(lse - l_pos)                                              # scalar


def _snico_loss_kernel(ha_ref, ea_ref, hb_ref, eb_ref, out_ref, *, temperature):
    # Cast once; inputs may be stored bf16 in HBM, all math stays f32 (safe on v5e too).
    ha = ha_ref[...].astype(jnp.float32)   # [N, Th, C]
    ea = ea_ref[...].astype(jnp.float32)   # [N, Te, C]
    hb = hb_ref[...].astype(jnp.float32)   # [N, Th, C]
    eb = eb_ref[...].astype(jnp.float32)   # [N, Te, C]

    # Temporal means (sublane-axis reductions).
    q_a = jnp.mean(ha, axis=1)             # [N, C]
    k_a = jnp.mean(ea, axis=1)             # [N, C]
    q_b = jnp.mean(hb, axis=1)             # [N, C]
    k_b = jnp.mean(eb, axis=1)             # [N, C]

    inv_t = jnp.float32(1.0 / temperature)
    ha_refinement = _nce(q_a, k_a, eb, inv_t)
    hb_refinement = _nce(q_b, k_b, ea, inv_t)
    loss = ha_refinement + hb_refinement

    # Packed scalar results: one SMEM f32[4] output, one tiny writeback.
    out_ref[0] = loss
    out_ref[1] = ha_refinement
    out_ref[2] = hb_refinement
    out_ref[3] = jnp.float32(0.0)


def snico_loss(contrast_pairs, temperature=0.07):
    """Pallas implementation of SniCoLoss.forward(contrast_pairs) -> scalar loss."""
    ha, ea = contrast_pairs['HA'], contrast_pairs['EA']
    hb, eb = contrast_pairs['HB'], contrast_pairs['EB']
    tensors = (ha, ea, hb, eb)

    n, _, c = ha.shape
    k_a = eb.shape[1]
    k_b = ea.shape[1]

    in_bytes = sum(int(x.size) * x.dtype.itemsize for x in tensors)
    total_elems = sum(int(x.size) for x in tensors)
    # Rough-but-honest accounting: means + norms + similarity dots + softmax-CE.
    flops = 6 * total_elems + 4 * n * c * (k_a + k_b)
    transcendentals = 2 * n * (k_a + k_b) + 8 * n  # exp / log / sqrt
    # f32 working set ~= 2x the (possibly bf16) inputs; keep headroom, cap well under
    # v7x's 64 MiB physical VMEM.
    vmem_limit = int(min(96 * 2**20, max(16 * 2**20, 6 * in_bytes)))

    out = pl.pallas_call(
        partial(_snico_loss_kernel, temperature=temperature),
        out_shape=jax.ShapeDtypeStruct((4,), jnp.float32),
        in_specs=[pl.BlockSpec(memory_space=pltpu.MemorySpace.VMEM)] * 4,
        out_specs=pl.BlockSpec(memory_space=pltpu.MemorySpace.SMEM),
        compiler_params=pltpu.CompilerParams(vmem_limit_bytes=vmem_limit),
        cost_estimate=pl.CostEstimate(
            flops=flops,
            transcendentals=transcendentals,
            bytes_accessed=in_bytes + 16,
        ),
    )(ha, ea, hb, eb)

    # Return device scalars only -- no float() host syncs (caller converts if it must).
    loss = out[0]
    return loss


def snico_loss_ref(ha, ea, hb, eb, temperature=0.07):
    """Pure-JAX transcription of the PyTorch SniCoLoss forward (validation only)."""
    def normalize(x, axis):
        return x / jnp.maximum(jnp.linalg.norm(x, axis=axis, keepdims=True), _NORM_EPS)

    def nce(q, k, neg):
        q = normalize(q, 1)
        k = normalize(k, 1)
        neg = jnp.transpose(neg, (0, 2, 1))                       # [N, C, K]
        neg = normalize(neg, 1)
        l_pos = jnp.einsum('nc,nc->n', q, k)[:, None]             # [N, 1]
        l_neg = jnp.einsum('nc,nck->nk', q, neg)                  # [N, K]
        logits = jnp.concatenate([l_pos, l_neg], axis=1) / temperature
        lse = jax.scipy.special.logsumexp(logits, axis=1)
        return jnp.mean(lse - logits[:, 0])                       # CE vs label 0

    ha_refinement = nce(jnp.mean(ha, axis=1), jnp.mean(ea, axis=1), eb)
    hb_refinement = nce(jnp.mean(hb, axis=1), jnp.mean(eb, axis=1), ea)
    return ha_refinement + hb_refinement


if __name__ == "__main__":
    key = jax.random.PRNGKey(0)
    N, T_EASY, T_HARD, C = 2, 8, 6, 32
    k1, k2, k3, k4 = jax.random.split(key, 4)

    HA = jax.random.normal(k1, (N, T_HARD, C), dtype=jnp.float32)
    EA = jax.random.normal(k2, (N, T_EASY, C), dtype=jnp.float32)
    HB = jax.random.normal(k3, (N, T_HARD, C), dtype=jnp.float32)
    EB = jax.random.normal(k4, (N, T_EASY, C), dtype=jnp.float32)
    contrast_pairs = {'HA': HA, 'EA': EA, 'HB': HB, 'EB': EB}

    loss = jax.block_until_ready(snico_loss(contrast_pairs))
    ref = jax.block_until_ready(snico_loss_ref(HA, EA, HB, EB))

    np.testing.assert_allclose(np.asarray(loss), np.asarray(ref), rtol=1e-4, atol=1e-4)
    print("KERNEL_OK")
</pallas_src>

<mosaic_0001>
module attributes {stable_mosaic.version = 11 : i64} {
  func.func @_snico_loss_kernel(%arg0: memref<2x6x32xf32, #tpu.memory_space<vmem>>, %arg1: memref<2x8x32xf32, #tpu.memory_space<vmem>>, %arg2: memref<2x6x32xf32, #tpu.memory_space<vmem>>, %arg3: memref<2x8x32xf32, #tpu.memory_space<vmem>>, %arg4: memref<4xf32, #tpu.memory_space<smem>>) attributes {dimension_semantics = [], scalar_prefetch = 0 : i64, scratch_operands = 0 : i64, tpu.core_type = #tpu.core_type<tc>} {
    %c0 = arith.constant 0 : index
    %c0_0 = arith.constant 0 : index
    %c0_1 = arith.constant 0 : index
    %0 = vector.load %arg0[%c0, %c0_0, %c0_1] : memref<2x6x32xf32, #tpu.memory_space<vmem>>, vector<2x6x32xf32>
    %c0_2 = arith.constant 0 : index
    %c0_3 = arith.constant 0 : index
    %c0_4 = arith.constant 0 : index
    %1 = vector.load %arg1[%c0_2, %c0_3, %c0_4] : memref<2x8x32xf32, #tpu.memory_space<vmem>>, vector<2x8x32xf32>
    %c0_5 = arith.constant 0 : index
    %c0_6 = arith.constant 0 : index
    %c0_7 = arith.constant 0 : index
    %2 = vector.load %arg2[%c0_5, %c0_6, %c0_7] : memref<2x6x32xf32, #tpu.memory_space<vmem>>, vector<2x6x32xf32>
    %c0_8 = arith.constant 0 : index
    %c0_9 = arith.constant 0 : index
    %c0_10 = arith.constant 0 : index
    %3 = vector.load %arg3[%c0_8, %c0_9, %c0_10] : memref<2x8x32xf32, #tpu.memory_space<vmem>>, vector<2x8x32xf32>
    %cst = arith.constant dense<0.000000e+00> : vector<2x32xf32>
    %4 = vector.multi_reduction <add>, %0, %cst [1] : vector<2x6x32xf32> to vector<2x32xf32>
    %cst_11 = arith.constant 6.000000e+00 : f32
    %5 = vector.broadcast %cst_11 : f32 to vector<2x32xf32>
    %6 = arith.divf %4, %5 : vector<2x32xf32>
    %cst_12 = arith.constant dense<0.000000e+00> : vector<2x32xf32>
    %7 = vector.multi_reduction <add>, %1, %cst_12 [1] : vector<2x8x32xf32> to vector<2x32xf32>
    %cst_13 = arith.constant 8.000000e+00 : f32
    %8 = vector.broadcast %cst_13 : f32 to vector<2x32xf32>
    %9 = arith.divf %7, %8 : vector<2x32xf32>
    %cst_14 = arith.constant dense<0.000000e+00> : vector<2x32xf32>
    %10 = vector.multi_reduction <add>, %2, %cst_14 [1] : vector<2x6x32xf32> to vector<2x32xf32>
    %cst_15 = arith.constant 6.000000e+00 : f32
    %11 = vector.broadcast %cst_15 : f32 to vector<2x32xf32>
    %12 = arith.divf %10, %11 : vector<2x32xf32>
    %cst_16 = arith.constant dense<0.000000e+00> : vector<2x32xf32>
    %13 = vector.multi_reduction <add>, %3, %cst_16 [1] : vector<2x8x32xf32> to vector<2x32xf32>
    %cst_17 = arith.constant 8.000000e+00 : f32
    %14 = vector.broadcast %cst_17 : f32 to vector<2x32xf32>
    %15 = arith.divf %13, %14 : vector<2x32xf32>
    %16 = arith.mulf %6, %6 : vector<2x32xf32>
    %cst_18 = arith.constant dense<0.000000e+00> : vector<2xf32>
    %17 = vector.multi_reduction <add>, %16, %cst_18 [1] : vector<2x32xf32> to vector<2xf32>
    %18 = vector.shape_cast %17 : vector<2xf32> to vector<2x1xf32>
    %19 = math.sqrt %18 : vector<2x1xf32>
    %cst_19 = arith.constant 9.99999996E-13 : f32
    %20 = vector.broadcast %cst_19 : f32 to vector<2x1xf32>
    %21 = arith.maximumf %19, %20 : vector<2x1xf32>
    %22 = vector.broadcast %21 : vector<2x1xf32> to vector<2x32xf32>
    %23 = arith.divf %6, %22 : vector<2x32xf32>
    %24 = arith.mulf %9, %9 : vector<2x32xf32>
    %cst_20 = arith.constant dense<0.000000e+00> : vector<2xf32>
    %25 = vector.multi_reduction <add>, %24, %cst_20 [1] : vector<2x32xf32> to vector<2xf32>
    %26 = vector.shape_cast %25 : vector<2xf32> to vector<2x1xf32>
    %27 = math.sqrt %26 : vector<2x1xf32>
    %cst_21 = arith.constant 9.99999996E-13 : f32
    %28 = vector.broadcast %cst_21 : f32 to vector<2x1xf32>
    %29 = arith.maximumf %27, %28 : vector<2x1xf32>
    %30 = vector.broadcast %29 : vector<2x1xf32> to vector<2x32xf32>
    %31 = arith.divf %9, %30 : vector<2x32xf32>
    %32 = arith.mulf %3, %3 : vector<2x8x32xf32>
    %cst_22 = arith.constant dense<0.000000e+00> : vector<2x8xf32>
    %33 = vector.multi_reduction <add>, %32, %cst_22 [2] : vector<2x8x32xf32> to vector<2x8xf32>
    %34 = vector.shape_cast %33 : vector<2x8xf32> to vector<2x8x1xf32>
    %35 = math.sqrt %34 : vector<2x8x1xf32>
    %cst_23 = arith.constant 9.99999996E-13 : f32
    %36 = vector.broadcast %cst_23 : f32 to vector<2x8x1xf32>
    %37 = arith.maximumf %35, %36 : vector<2x8x1xf32>
    %38 = vector.broadcast %37 : vector<2x8x1xf32> to vector<2x8x32xf32>
    %39 = arith.divf %3, %38 : vector<2x8x32xf32>
    %40 = arith.mulf %23, %31 : vector<2x32xf32>
    %cst_24 = arith.constant dense<0.000000e+00> : vector<2xf32>
    %41 = vector.multi_reduction <add>, %40, %cst_24 [1] : vector<2x32xf32> to vector<2xf32>
    %42 = vector.shape_cast %41 : vector<2xf32> to vector<2x1xf32>
    %cst_25 = arith.constant 14.2857141 : f32
    %43 = vector.broadcast %cst_25 : f32 to vector<2x1xf32>
    %44 = arith.mulf %42, %43 : vector<2x1xf32>
    %45 = vector.shape_cast %23 : vector<2x32xf32> to vector<2x1x32xf32>
    %46 = vector.broadcast %45 : vector<2x1x32xf32> to vector<2x8x32xf32>
    %47 = arith.mulf %46, %39 : vector<2x8x32xf32>
    %cst_26 = arith.constant dense<0.000000e+00> : vector<2x8xf32>
    %48 = vector.multi_reduction <add>, %47, %cst_26 [2] : vector<2x8x32xf32> to vector<2x8xf32>
    %cst_27 = arith.constant 14.2857141 : f32
    %49 = vector.broadcast %cst_27 : f32 to vector<2x8xf32>
    %50 = arith.mulf %48, %49 : vector<2x8xf32>
    %cst_28 = arith.constant dense<0xFF800000> : vector<2xf32>
    %51 = vector.multi_reduction <maximumf>, %50, %cst_28 [1] : vector<2x8xf32> to vector<2xf32>
    %52 = vector.shape_cast %51 : vector<2xf32> to vector<2x1xf32>
    %53 = arith.maximumf %44, %52 : vector<2x1xf32>
    %54 = arith.subf %44, %53 : vector<2x1xf32>
    %55 = math.exp %54 : vector<2x1xf32>
    %56 = vector.broadcast %53 : vector<2x1xf32> to vector<2x8xf32>
    %57 = arith.subf %50, %56 : vector<2x8xf32>
    %58 = math.exp %57 : vector<2x8xf32>
    %cst_29 = arith.constant dense<0.000000e+00> : vector<2xf32>
    %59 = vector.multi_reduction <add>, %58, %cst_29 [1] : vector<2x8xf32> to vector<2xf32>
    %60 = vector.shape_cast %59 : vector<2xf32> to vector<2x1xf32>
    %61 = arith.addf %55, %60 : vector<2x1xf32>
    %62 = math.log %61 : vector<2x1xf32>
    %63 = arith.addf %53, %62 : vector<2x1xf32>
    %64 = arith.subf %63, %44 : vector<2x1xf32>
    %65 = vector.shape_cast %64 : vector<2x1xf32> to vector<1x2x1xf32>
    %cst_30 = arith.constant dense<0.000000e+00> : vector<1xf32>
    %66 = vector.multi_reduction <add>, %65, %cst_30 [1, 2] : vector<1x2x1xf32> to vector<1xf32>
    %67 = vector.shape_cast %66 : vector<1xf32> to vector<1x1x1xf32>
    %68 = vector.extract %67[0, 0, 0] : f32 from vector<1x1x1xf32>
    %cst_31 = arith.constant 2.000000e+00 : f32
    %69 = arith.divf %68, %cst_31 : f32
    %70 = arith.mulf %12, %12 : vector<2x32xf32>
    %cst_32 = arith.constant dense<0.000000e+00> : vector<2xf32>
    %71 = vector.multi_reduction <add>, %70, %cst_32 [1] : vector<2x32xf32> to vector<2xf32>
    %72 = vector.shape_cast %71 : vector<2xf32> to vector<2x1xf32>
    %73 = math.sqrt %72 : vector<2x1xf32>
    %cst_33 = arith.constant 9.99999996E-13 : f32
    %74 = vector.broadcast %cst_33 : f32 to vector<2x1xf32>
    %75 = arith.maximumf %73, %74 : vector<2x1xf32>
    %76 = vector.broadcast %75 : vector<2x1xf32> to vector<2x32xf32>
    %77 = arith.divf %12, %76 : vector<2x32xf32>
    %78 = arith.mulf %15, %15 : vector<2x32xf32>
    %cst_34 = arith.constant dense<0.000000e+00> : vector<2xf32>
    %79 = vector.multi_reduction <add>, %78, %cst_34 [1] : vector<2x32xf32> to vector<2xf32>
    %80 = vector.shape_cast %79 : vector<2xf32> to vector<2x1xf32>
    %81 = math.sqrt %80 : vector<2x1xf32>
    %cst_35 = arith.constant 9.99999996E-13 : f32
    %82 = vector.broadcast %cst_35 : f32 to vector<2x1xf32>
    %83 = arith.maximumf %81, %82 : vector<2x1xf32>
    %84 = vector.broadcast %83 : vector<2x1xf32> to vector<2x32xf32>
    %85 = arith.divf %15, %84 : vector<2x32xf32>
    %86 = arith.mulf %1, %1 : vector<2x8x32xf32>
    %cst_36 = arith.constant dense<0.000000e+00> : vector<2x8xf32>
    %87 = vector.multi_reduction <add>, %86, %cst_36 [2] : vector<2x8x32xf32> to vector<2x8xf32>
    %88 = vector.shape_cast %87 : vector<2x8xf32> to vector<2x8x1xf32>
    %89 = math.sqrt %88 : vector<2x8x1xf32>
    %cst_37 = arith.constant 9.99999996E-13 : f32
    %90 = vector.broadcast %cst_37 : f32 to vector<2x8x1xf32>
    %91 = arith.maximumf %89, %90 : vector<2x8x1xf32>
    %92 = vector.broadcast %91 : vector<2x8x1xf32> to vector<2x8x32xf32>
    %93 = arith.divf %1, %92 : vector<2x8x32xf32>
    %94 = arith.mulf %77, %85 : vector<2x32xf32>
    %cst_38 = arith.constant dense<0.000000e+00> : vector<2xf32>
    %95 = vector.multi_reduction <add>, %94, %cst_38 [1] : vector<2x32xf32> to vector<2xf32>
    %96 = vector.shape_cast %95 : vector<2xf32> to vector<2x1xf32>
    %cst_39 = arith.constant 14.2857141 : f32
    %97 = vector.broadcast %cst_39 : f32 to vector<2x1xf32>
    %98 = arith.mulf %96, %97 : vector<2x1xf32>
    %99 = vector.shape_cast %77 : vector<2x32xf32> to vector<2x1x32xf32>
    %100 = vector.broadcast %99 : vector<2x1x32xf32> to vector<2x8x32xf32>
    %101 = arith.mulf %100, %93 : vector<2x8x32xf32>
    %cst_40 = arith.constant dense<0.000000e+00> : vector<2x8xf32>
    %102 = vector.multi_reduction <add>, %101, %cst_40 [2] : vector<2x8x32xf32> to vector<2x8xf32>
    %cst_41 = arith.constant 14.2857141 : f32
    %103 = vector.broadcast %cst_41 : f32 to vector<2x8xf32>
    %104 = arith.mulf %102, %103 : vector<2x8xf32>
    %cst_42 = arith.constant dense<0xFF800000> : vector<2xf32>
    %105 = vector.multi_reduction <maximumf>, %104, %cst_42 [1] : vector<2x8xf32> to vector<2xf32>
    %106 = vector.shape_cast %105 : vector<2xf32> to vector<2x1xf32>
    %107 = arith.maximumf %98, %106 : vector<2x1xf32>
    %108 = arith.subf %98, %107 : vector<2x1xf32>
    %109 = math.exp %108 : vector<2x1xf32>
    %110 = vector.broadcast %107 : vector<2x1xf32> to vector<2x8xf32>
    %111 = arith.subf %104, %110 : vector<2x8xf32>
    %112 = math.exp %111 : vector<2x8xf32>
    %cst_43 = arith.constant dense<0.000000e+00> : vector<2xf32>
    %113 = vector.multi_reduction <add>, %112, %cst_43 [1] : vector<2x8xf32> to vector<2xf32>
    %114 = vector.shape_cast %113 : vector<2xf32> to vector<2x1xf32>
    %115 = arith.addf %109, %114 : vector<2x1xf32>
    %116 = math.log %115 : vector<2x1xf32>
    %117 = arith.addf %107, %116 : vector<2x1xf32>
    %118 = arith.subf %117, %98 : vector<2x1xf32>
    %119 = vector.shape_cast %118 : vector<2x1xf32> to vector<1x2x1xf32>
    %cst_44 = arith.constant dense<0.000000e+00> : vector<1xf32>
    %120 = vector.multi_reduction <add>, %119, %cst_44 [1, 2] : vector<1x2x1xf32> to vector<1xf32>
    %121 = vector.shape_cast %120 : vector<1xf32> to vector<1x1x1xf32>
    %122 = vector.extract %121[0, 0, 0] : f32 from vector<1x1x1xf32>
    %cst_45 = arith.constant 2.000000e+00 : f32
    %123 = arith.divf %122, %cst_45 : f32
    %124 = arith.addf %69, %123 : f32
    %c0_46 = arith.constant 0 : index
    %125 = memref.load %arg4[%c0_46] : memref<4xf32, #tpu.memory_space<smem>>
    memref.store %124, %arg4[%c0_46] : memref<4xf32, #tpu.memory_space<smem>>
    %c1 = arith.constant 1 : index
    %126 = memref.load %arg4[%c1] : memref<4xf32, #tpu.memory_space<smem>>
    memref.store %69, %arg4[%c1] : memref<4xf32, #tpu.memory_space<smem>>
    %c2 = arith.constant 2 : index
    %127 = memref.load %arg4[%c2] : memref<4xf32, #tpu.memory_space<smem>>
    memref.store %123, %arg4[%c2] : memref<4xf32, #tpu.memory_space<smem>>
    %cst_47 = arith.constant 0.000000e+00 : f32
    %c3 = arith.constant 3 : index
    %128 = memref.load %arg4[%c3] : memref<4xf32, #tpu.memory_space<smem>>
    memref.store %cst_47, %arg4[%c3] : memref<4xf32, #tpu.memory_space<smem>>
    return
  }
}

</mosaic_0001>

<llo_original>
// kernel: tpu_custom_call.1
$region0: #{tpu_custom_call.1}
  #allocation0 [shape = 'u32[]', space=smem, size = 0x4, offset = 0x4, fixed_abs, tag = 'smem constant byte address 0x4 - core index']
  #allocation1 [shape = 'u32[144,128]{1,0:T(1,128)}', space=vmem, size = 0x12000, scoped, tag = 'internal scratch']
  %s0 = inlined_call_operand.vmem [shape: f32[2,6,32], index: 0, kind: input, shape index: {}]
  %s1 = inlined_call_operand.vmem [shape: f32[2,8,32], index: 1, kind: input, shape index: {}]
  %s2 = inlined_call_operand.vmem [shape: f32[2,6,32], index: 2, kind: input, shape index: {}]
  %s3 = inlined_call_operand.vmem [shape: f32[2,8,32], index: 3, kind: input, shape index: {}]
  %s4 = inlined_call_operand.hbm [shape: f32[4], index: 4, kind: output, shape index: {}]
  %s5 = sld [smem:[#allocation0]]
  $region26: #{tpu_custom_call.1} parent=0
    _
  %s7 = ssub.s32 1, %s5
  %s8 = scalar_select 0, %s7, %s5
  $region1: #{tpu_custom_call.1} parent=0
    #allocation2 [shape = 'u8[512]{0}', space=smem, size = 0x200, scoped, tag = 'output window, operand 0, single buffered']
    #allocation3 [shape = 's32[1]{0}', space=sflag, size = 0x4, scoped, tag = 'scoped memory for tpu_custom_call.1']
    %9 = vsyncpa [#allocation3], 0
    // Predicated region
    $region2: #{tpu_custom_call.1} parent=1 // pred_check
      _
    $region3: #{tpu_custom_call.1} parent=1 // pred_check_branch
      %11 = sbr.rel (0) target = $region5
    $region4: #{tpu_custom_call.1} parent=1 // pred_region
      _
    $region5: #{tpu_custom_call.1} parent=1 // pred_fallthru
      _
    // Predicated region
    $region6: #{tpu_custom_call.1} parent=1 // pred_check
      _
    $region7: #{tpu_custom_call.1} parent=1 // pred_check_branch
      %13 = sbr.rel (0) target = $region9
    $region8: #{tpu_custom_call.1} parent=1 // pred_region
      _
    $region9: #{tpu_custom_call.1} parent=1 // pred_fallthru
      _
    // Predicated region
    $region10: #{tpu_custom_call.1} parent=1 // pred_check
      _
    $region11: #{tpu_custom_call.1} parent=1 // pred_check_branch
      %15 = sbr.rel (0) target = $region13
    $region12: #{tpu_custom_call.1} parent=1 // pred_region
      _
    $region13: #{tpu_custom_call.1} parent=1 // pred_fallthru
      _
    // Predicated region
    $region14: #{tpu_custom_call.1} parent=1 // pred_check
      _
    $region15: #{tpu_custom_call.1} parent=1 // pred_check_branch
      %17 = sbr.rel (0) target = $region17
    $region16: #{tpu_custom_call.1} parent=1 // pred_region
      _
    $region17: #{tpu_custom_call.1} parent=1 // pred_fallthru
      _
    %v18 = vld [vmem:[%s0] sm:$0x3f]
    %v19 = vld [vmem:[%s0 + $0x8] sm:$0x3f]
    %v20 = vld [vmem:[%s1] sm:$0xff]
    %v21 = vld [vmem:[%s1 + $0x8] sm:$0xff]
    %v22 = vld [vmem:[%s2] sm:$0x3f]
    %v23 = vld [vmem:[%s2 + $0x8] sm:$0x3f]
    %v24 = vld [vmem:[%s3] sm:$0xff]
    %v25 = vld [vmem:[%s3 + $0x8] sm:$0xff]
    %vm26 = vcmask 259072
    %v27 = vsel %vm26, %v18, 0.0
    %v28 = vrot.slane %v27, 4
    %v29 = vadd.f32 %v27, %v28
    %v30 = vrot.slane %v29, 2
    %v31 = vadd.f32 %v29, %v30
    %v32 = vrot.slane %v31, 1
    %v33 = vadd.f32 %v31, %v32
    %v34 = vsel %vm26, %v19, 0.0
    %v35 = vrot.slane %v34, 4
    %v36 = vadd.f32 %v34, %v35
    %v37 = vrot.slane %v36, 2
    %v38 = vadd.f32 %v36, %v37
    %v39 = vrot.slane %v38, 1
    %v40 = vadd.f32 %v38, %v39
    %v41 = vrcp.pop 6.0
    %v42 = vmul.f32 %v33, %v41
    %v43 = vmul.f32 %v40, %v41
    %vm44 = vcmask 261120
    %v45 = vsel %vm44, %v20, 0.0
    %v46 = vrot.slane %v45, 4
    %v47 = vadd.f32 %v45, %v46
    %v48 = vrot.slane %v47, 2
    %v49 = vadd.f32 %v47, %v48
    %v50 = vrot.slane %v49, 1
    %v51 = vadd.f32 %v49, %v50
    %v52 = vsel %vm44, %v21, 0.0
    %v53 = vrot.slane %v52, 4
    %v54 = vadd.f32 %v52, %v53
    %v55 = vrot.slane %v54, 2
    %v56 = vadd.f32 %v54, %v55
    %v57 = vrot.slane %v56, 1
    %v58 = vadd.f32 %v56, %v57
    %v59 = vrcp.pop 8.0
    %v60 = vmul.f32 %v51, %v59
    %v61 = vmul.f32 %v58, %v59
    %v62 = vsel %vm26, %v22, 0.0
    %v63 = vrot.slane %v62, 4
    %v64 = vadd.f32 %v62, %v63
    %v65 = vrot.slane %v64, 2
    %v66 = vadd.f32 %v64, %v65
    %v67 = vrot.slane %v66, 1
    %v68 = vadd.f32 %v66, %v67
    %v69 = vsel %vm26, %v23, 0.0
    %v70 = vrot.slane %v69, 4
    %v71 = vadd.f32 %v69, %v70
    %v72 = vrot.slane %v71, 2
    %v73 = vadd.f32 %v71, %v72
    %v74 = vrot.slane %v73, 1
    %v75 = vadd.f32 %v73, %v74
    %v76 = vmul.f32 %v68, %v41
    %v77 = vmul.f32 %v75, %v41
    %v78 = vsel %vm44, %v24, 0.0
    %v79 = vrot.slane %v78, 4
    %v80 = vadd.f32 %v78, %v79
    %v81 = vrot.slane %v80, 2
    %v82 = vadd.f32 %v80, %v81
    %v83 = vrot.slane %v82, 1
    %v84 = vadd.f32 %v82, %v83
    %v85 = vsel %vm44, %v25, 0.0
    %v86 = vrot.slane %v85, 4
    %v87 = vadd.f32 %v85, %v86
    %v88 = vrot.slane %v87, 2
    %v89 = vadd.f32 %v87, %v88
    %v90 = vrot.slane %v89, 1
    %v91 = vadd.f32 %v89, %v90
    %v92 = vmul.f32 %v84, %v59
    %v93 = vmul.f32 %v91, %v59
    %v94 = vmul.f32 %v42, %v42
    %v95 = vmul.f32 %v43, %v43
    %vm98 = vcmask 1041409
    %v99 = vsel %vm98, %v95, %v94
    %vm101 = vcmask 254976
    %v102 = vsel %vm101, %v99, 0.0
    %103 = vadd.xlane.f32.xlu0 %v102
    %v104 = vpop.xlane.xlu0 %103
    %v105 = vrsqrt.pop %v104
    %v106 = vmul.f32 %v104, %v105
    %vm107 = vcmp.eq.f32.partialorder %v104, inf
    %v108 = vsel %vm107, %v104, %v106
    %vm109 = vcmp.eq.f32.partialorder %v104, 0.0
    %v110 = vand.u32 %v104, 2147483648
    %v111 = vsel %vm109, %v110, %v108
    %v112 = vmax.f32 %v111, 1e-12
    %v114 = vrot.slane %v112, 1
    %v117 = vrcp.pop %v112
    %v118 = vmul.f32 %v42, %v117
    %v119 = vrcp.pop %v114
    %v120 = vmul.f32 %v43, %v119
    %v121 = vmul.f32 %v60, %v60
    %v122 = vmul.f32 %v61, %v61
    %v125 = vsel %vm98, %v122, %v121
    %v127 = vsel %vm101, %v125, 0.0
    %128 = vadd.xlane.f32.xlu0 %v127
    %v129 = vpop.xlane.xlu0 %128
    %v130 = vrsqrt.pop %v129
    %v131 = vmul.f32 %v129, %v130
    %vm132 = vcmp.eq.f32.partialorder %v129, inf
    %v133 = vsel %vm132, %v129, %v131
    %vm134 = vcmp.eq.f32.partialorder %v129, 0.0
    %v135 = vand.u32 %v129, 2147483648
    %v136 = vsel %vm134, %v135, %v133
    %v137 = vmax.f32 %v136, 1e-12
    %v139 = vrot.slane %v137, 1
    %v142 = vrcp.pop %v137
    %v143 = vmul.f32 %v60, %v142
    %v144 = vrcp.pop %v139
    %v145 = vmul.f32 %v61, %v144
    %v146 = vmul.f32 %v24, %v24
    %v147 = vmul.f32 %v25, %v25
    %v148 = vsel %vm44, %v146, 0.0
    %149 = vadd.xlane.f32.xlu0 %v148
    %v150 = vpop.xlane.xlu0 %149
    %v151 = vsel %vm44, %v147, 0.0
    %152 = vadd.xlane.f32.xlu0 %v151
    %v153 = vpop.xlane.xlu0 %152
    %v154 = vrsqrt.pop %v150
    %v155 = vmul.f32 %v150, %v154
    %vm156 = vcmp.eq.f32.partialorder %v150, inf
    %v157 = vsel %vm156, %v150, %v155
    %vm158 = vcmp.eq.f32.partialorder %v150, 0.0
    %v159 = vand.u32 %v150, 2147483648
    %v160 = vsel %vm158, %v159, %v157
    %v161 = vrsqrt.pop %v153
    %v162 = vmul.f32 %v153, %v161
    %vm163 = vcmp.eq.f32.partialorder %v153, inf
    %v164 = vsel %vm163, %v153, %v162
    %vm165 = vcmp.eq.f32.partialorder %v153, 0.0
    %v166 = vand.u32 %v153, 2147483648
    %v167 = vsel %vm165, %v166, %v164
    %v168 = vmax.f32 %v160, 1e-12
    %v169 = vmax.f32 %v167, 1e-12
    %v170 = vrcp.pop %v168
    %v171 = vmul.f32 %v24, %v170
    %v172 = vrcp.pop %v169
    %v173 = vmul.f32 %v25, %v172
    %v174 = vmul.f32 %v118, %v143
    %v175 = vmul.f32 %v120, %v145
    %v178 = vrot.slane %v175, 7
    %v179 = vsel %vm98, %v178, %v174
    %v181 = vsel %vm101, %v179, 0.0
    %182 = vadd.xlane.f32.xlu0 %v181
    %v183 = vpop.xlane.xlu0 %182
    %v184 = vmul.f32 %v183, 14.285714
    %v185 = vlaneseq
    %v186 = vshrl.u32 %v185, 7
    %v187 = vsub.s32 0, %v186
    %v188 = vrot.slane %v118, %v187
    %v189 = vlaneseq
    %v190 = vshrl.u32 %v189, 7
    %v191 = vsub.s32 0, %v190
    %v192 = vrot.slane %v120, %v191
    %v193 = vmul.f32 %v188, %v171
    %v194 = vmul.f32 %v192, %v173
    %v195 = vsel %vm44, %v193, 0.0
    %196 = vadd.xlane.f32.xlu0 %v195
    %v197 = vpop.xlane.xlu0 %196
    %v198 = vsel %vm44, %v194, 0.0
    %199 = vadd.xlane.f32.xlu0 %v198
    %v200 = vpop.xlane.xlu0 %199
    %v201 = vmul.f32 %v197, 14.285714
    %v202 = vmul.f32 %v200, 14.285714
    %v205 = vlaneseq
    %v206 = vand.u32 %v205, 127
    %v207 = vlaneseq
    %v208 = vshrl.u32 %v207, 7
    %v209 = vsub.s32 %v206, %v208
    %v210 = vrot.slane %v201, %v209
    %v211 = vlaneseq
    %v212 = vshrl.u32 %v211, 7
    %v213 = vsub.s32 %v206, %v212
    %v214 = vrot.slane %v202, %v213
    %v215 = vsel %vm98, %v214, %v210
    %vm217 = vcmask 58368
    %v218 = vsel %vm217, %v215, -inf
    %219 = vmax.xlane.f32.xlu0 %v218
    %v220 = vpop.xlane.xlu0 %219
    %v221 = vmax.f32 %v184, %v220
    %v222 = vsub.f32 %v184, %v221
    %v223 = vmul.f32 %v222, 1.442695
    %v224 = vpow.pop %v223
    %v226 = vlaneseq
    %v227 = vshrl.u32 %v226, 7
    %v228 = vsub.s32 0, %v227
    %v229 = vrot.slane %v221, %v228
    %v230 = vlaneseq
    %v231 = vshrl.u32 %v230, 7
    %v232 = vsub.s32 1, %v231
    %v233 = vrot.slane %v221, %v232
    %v236 = vsub.f32 %v201, %v229
    %v237 = vsub.f32 %v202, %v233
    %v238 = vmul.f32 %v236, 1.442695
    %v239 = vpow.pop %v238
    %v240 = vmul.f32 %v237, 1.442695
    %v241 = vpow.pop %v240
    %244 = vset.pattern.permute.xlu0 0
    %245 = vperm.xlu0 %244, %v239
    %v246 = vpop.permute.xlu0 %245
    %247 = vset.pattern.permute.xlu0 0
    %248 = vperm.xlu0 %247, %v241
    %v249 = vpop.permute.xlu0 %248
    %v250 = vlaneseq
    %v251 = vshrl.u32 %v250, 7
    %v252 = vsub.s32 %v206, %v251
    %v253 = vrot.slane %v246, %v252
    %v254 = vlaneseq
    %v255 = vshrl.u32 %v254, 7
    %v256 = vsub.s32 %v206, %v255
    %v257 = vrot.slane %v249, %v256
    %v258 = vsel %vm98, %v257, %v253
    %v260 = vsel %vm217, %v258, 0.0
    %261 = vadd.xlane.f32.xlu0 %v260
    %v262 = vpop.xlane.xlu0 %261
    %v263 = vadd.f32 %v224, %v262
    %v264 = vlog2.pop %v263
    %v265 = vmul.f32 %v264, 0.6931472
    %v266 = vadd.f32 %v221, %v265
    %v267 = vsub.f32 %v266, %v184
    %vm268 = vcmask 1024
    %v269 = vsel %vm268, %v267, 0.0
    %270 = vadd.xlane.f32.xlu0 %v269
    %v271 = vpop.xlane.xlu0 %270
    %v272 = vrot.slane %v271, 4
    %v273 = vadd.f32 %v271, %v272
    %v274 = vrot.slane %v273, 2
    %v275 = vadd.f32 %v273, %v274
    %v276 = vrot.slane %v275, 1
    %v277 = vadd.f32 %v275, %v276
    %s278 = vtos %v277
    %v279 = vrcp.pop 2.0
    %s280 = vtos %v279
    %s281 = smul.f32 %s278, %s280
    %v282 = vmul.f32 %v76, %v76
    %v283 = vmul.f32 %v77, %v77
    %v286 = vsel %vm98, %v283, %v282
    %v288 = vsel %vm101, %v286, 0.0
    %289 = vadd.xlane.f32.xlu0 %v288
    %v290 = vpop.xlane.xlu0 %289
    %v291 = vrsqrt.pop %v290
    %v292 = vmul.f32 %v290, %v291
    %vm293 = vcmp.eq.f32.partialorder %v290, inf
    %v294 = vsel %vm293, %v290, %v292
    %vm295 = vcmp.eq.f32.partialorder %v290, 0.0
    %v296 = vand.u32 %v290, 2147483648
    %v297 = vsel %vm295, %v296, %v294
    %v298 = vmax.f32 %v297, 1e-12
    %v300 = vrot.slane %v298, 1
    %v303 = vrcp.pop %v298
    %v304 = vmul.f32 %v76, %v303
    %v305 = vrcp.pop %v300
    %v306 = vmul.f32 %v77, %v305
    %v307 = vmul.f32 %v92, %v92
    %v308 = vmul.f32 %v93, %v93
    %v311 = vsel %vm98, %v308, %v307
    %v313 = vsel %vm101, %v311, 0.0
    %314 = vadd.xlane.f32.xlu0 %v313
    %v315 = vpop.xlane.xlu0 %314
    %v316 = vrsqrt.pop %v315
    %v317 = vmul.f32 %v315, %v316
    %vm318 = vcmp.eq.f32.partialorder %v315, inf
    %v319 = vsel %vm318, %v315, %v317
    %vm320 = vcmp.eq.f32.partialorder %v315, 0.0
    %v321 = vand.u32 %v315, 2147483648
    %v322 = vsel %vm320, %v321, %v319
    %v323 = vmax.f32 %v322, 1e-12
    %v325 = vrot.slane %v323, 1
    %v328 = vrcp.pop %v323
    %v329 = vmul.f32 %v92, %v328
    %v330 = vrcp.pop %v325
    %v331 = vmul.f32 %v93, %v330
    %v332 = vmul.f32 %v20, %v20
    %v333 = vmul.f32 %v21, %v21
    %v334 = vsel %vm44, %v332, 0.0
    %335 = vadd.xlane.f32.xlu0 %v334
    %v336 = vpop.xlane.xlu0 %335
    %v337 = vsel %vm44, %v333, 0.0
    %338 = vadd.xlane.f32.xlu0 %v337
    %v339 = vpop.xlane.xlu0 %338
    %v340 = vrsqrt.pop %v336
    %v341 = vmul.f32 %v336, %v340
    %vm342 = vcmp.eq.f32.partialorder %v336, inf
    %v343 = vsel %vm342, %v336, %v341
    %vm344 = vcmp.eq.f32.partialorder %v336, 0.0
    %v345 = vand.u32 %v336, 2147483648
    %v346 = vsel %vm344, %v345, %v343
    %v347 = vrsqrt.pop %v339
    %v348 = vmul.f32 %v339, %v347
    %vm349 = vcmp.eq.f32.partialorder %v339, inf
    %v350 = vsel %vm349, %v339, %v348
    %vm351 = vcmp.eq.f32.partialorder %v339, 0.0
    %v352 = vand.u32 %v339, 2147483648
    %v353 = vsel %vm351, %v352, %v350
    %v354 = vmax.f32 %v346, 1e-12
    %v355 = vmax.f32 %v353, 1e-12
    %v356 = vrcp.pop %v354
    %v357 = vmul.f32 %v20, %v356
    %v358 = vrcp.pop %v355
    %v359 = vmul.f32 %v21, %v358
    %v360 = vmul.f32 %v304, %v329
    %v361 = vmul.f32 %v306, %v331
    %v364 = vrot.slane %v361, 7
    %v365 = vsel %vm98, %v364, %v360
    %v367 = vsel %vm101, %v365, 0.0
    %368 = vadd.xlane.f32.xlu0 %v367
    %v369 = vpop.xlane.xlu0 %368
    %v370 = vmul.f32 %v369, 14.285714
    %v371 = vlaneseq
    %v372 = vshrl.u32 %v371, 7
    %v373 = vsub.s32 0, %v372
    %v374 = vrot.slane %v304, %v373
    %v375 = vlaneseq
    %v376 = vshrl.u32 %v375, 7
    %v377 = vsub.s32 0, %v376
    %v378 = vrot.slane %v306, %v377
    %v379 = vmul.f32 %v374, %v357
    %v380 = vmul.f32 %v378, %v359
    %v381 = vsel %vm44, %v379, 0.0
    %382 = vadd.xlane.f32.xlu0 %v381
    %v383 = vpop.xlane.xlu0 %382
    %v384 = vsel %vm44, %v380, 0.0
    %385 = vadd.xlane.f32.xlu0 %v384
    %v386 = vpop.xlane.xlu0 %385
    %v387 = vmul.f32 %v383, 14.285714
    %v388 = vmul.f32 %v386, 14.285714
    %v391 = vlaneseq
    %v392 = vshrl.u32 %v391, 7
    %v393 = vsub.s32 %v206, %v392
    %v394 = vrot.slane %v387, %v393
    %v395 = vlaneseq
    %v396 = vshrl.u32 %v395, 7
    %v397 = vsub.s32 %v206, %v396
    %v398 = vrot.slane %v388, %v397
    %v399 = vsel %vm98, %v398, %v394
    %v401 = vsel %vm217, %v399, -inf
    %402 = vmax.xlane.f32.xlu0 %v401
    %v403 = vpop.xlane.xlu0 %402
    %v404 = vmax.f32 %v370, %v403
    %v405 = vsub.f32 %v370, %v404
    %v406 = vmul.f32 %v405, 1.442695
    %v407 = vpow.pop %v406
    %v409 = vlaneseq
    %v410 = vshrl.u32 %v409, 7
    %v411 = vsub.s32 0, %v410
    %v412 = vrot.slane %v404, %v411
    %v413 = vlaneseq
    %v414 = vshrl.u32 %v413, 7
    %v415 = vsub.s32 1, %v414
    %v416 = vrot.slane %v404, %v415
    %v419 = vsub.f32 %v387, %v412
    %v420 = vsub.f32 %v388, %v416
    %v421 = vmul.f32 %v419, 1.442695
    %v422 = vpow.pop %v421
    %v423 = vmul.f32 %v420, 1.442695
    %v424 = vpow.pop %v423
    %427 = vset.pattern.permute.xlu0 0
    %428 = vperm.xlu0 %427, %v422
    %v429 = vpop.permute.xlu0 %428
    %430 = vset.pattern.permute.xlu0 0
    %431 = vperm.xlu0 %430, %v424
    %v432 = vpop.permute.xlu0 %431
    %v433 = vlaneseq
    %v434 = vshrl.u32 %v433, 7
    %v435 = vsub.s32 %v206, %v434
    %v436 = vrot.slane %v429, %v435
    %v437 = vlaneseq
    %v438 = vshrl.u32 %v437, 7
    %v439 = vsub.s32 %v206, %v438
    %v440 = vrot.slane %v432, %v439
    %v441 = vsel %vm98, %v440, %v436
    %v443 = vsel %vm217, %v441, 0.0
    %444 = vadd.xlane.f32.xlu0 %v443
    %v445 = vpop.xlane.xlu0 %444
    %v446 = vadd.f32 %v407, %v445
    %v447 = vlog2.pop %v446
    %v448 = vmul.f32 %v447, 0.6931472
    %v449 = vadd.f32 %v404, %v448
    %v450 = vsub.f32 %v449, %v370
    %v451 = vsel %vm268, %v450, 0.0
    %452 = vadd.xlane.f32.xlu0 %v451
    %v453 = vpop.xlane.xlu0 %452
    %v454 = vrot.slane %v453, 4
    %v455 = vadd.f32 %v453, %v454
    %v456 = vrot.slane %v455, 2
    %v457 = vadd.f32 %v455, %v456
    %v458 = vrot.slane %v457, 1
    %v459 = vadd.f32 %v457, %v458
    %s460 = vtos %v459
    %v461 = vrcp.pop 2.0
    %s462 = vtos %v461
    %s463 = smul.f32 %s460, %s462
    %s464 = sadd.f32 %s281, %s463
    %s465 = scalar_lea.smem [#allocation2], 0
    %466 = sst [smem:[%s465]] %s464
    %s467 = scalar_lea.smem [#allocation2], 1
    %468 = sst [smem:[%s467]] %s281
    %s469 = scalar_lea.smem [#allocation2], 2
    %470 = sst [smem:[%s469]] %s463
    %s471 = scalar_lea.smem [#allocation2], 3
    %472 = sst [smem:[%s471]] 0.0
    // Predicated region
    $region18: #{tpu_custom_call.1} parent=1 // pred_check
      _
    $region19: #{tpu_custom_call.1} parent=1 // pred_check_branch
      %474 = sbr.rel (0) target = $region21
    $region20: #{tpu_custom_call.1} parent=1 // pred_region
      %s476 = ssub.s32 16, 16
      %477 = vsyncadd [#allocation3], %s476
      %480 = dma.smem_to_hbm [#allocation2], 16, %s4, [#allocation3]
    $region21: #{tpu_custom_call.1} parent=1 // pred_fallthru
      _
    // Predicated region
    $region22: #{tpu_custom_call.1} parent=1 // pred_check
      _
    $region23: #{tpu_custom_call.1} parent=1 // pred_check_branch
      %482 = sbr.rel (0) target = $region25
    $region24: #{tpu_custom_call.1} parent=1 // pred_region
      %483 = dma.done [#allocation3], 16
    $region25: #{tpu_custom_call.1} parent=1 // pred_fallthru
      _
    %484 = sfence
    %485 = vsyncpa [#allocation3], 1

</llo_original>
